<compile_context>
chip_gen: v7x
topology: tpu7x:2x2x1
jax: 0.10.0
libtpu: 0.0.40
codegen_flags: <defaults>
</compile_context>

<pallas_src>
import functools
import math

import jax
import jax.numpy as jnp
import numpy as np
from jax import lax
from jax.experimental import pallas as pl
from jax.experimental.pallas import tpu as pltpu


# --------------------------- host-built projection operand ---------------------------
def _build_m2(H, W, R):
    """[H*W, R] operand M2 = P @ TCUM with 0/1 entries (bf16-exact).

    For pixel r = h*W + w and column j = b*W + m (blocks b = sum_x, sum_y, diag,
    anti-diag), M2[r, j] = 1 iff the pixel's bin in block b is <= m, so x @ M2
    directly yields the cumulative sums of the four projections. Column 4*W is
    all ones (total plane sum, used for the volume); columns >= 4*W+1 are zero pad.
    """
    hh = np.arange(H)[:, None]
    ww = np.arange(W)[None, :]
    bins = np.stack([
        np.broadcast_to(hh, (H, W)),     # marginal over last dim (indexed by h)
        np.broadcast_to(ww, (H, W)),     # marginal over 2nd-to-last dim (indexed by w)
        (ww - hh) % W,                   # circular diagonal
        (hh - ww) % W,                   # circular anti-diagonal
    ], axis=2)                           # [H, W, 4]
    m = np.arange(W)
    cum = bins[:, :, :, None] <= m[None, None, None, :]          # [H, W, 4, W]
    M = cum.reshape(H * W, 4 * W).astype(np.float32)
    out = np.zeros((H * W, R), np.float32)
    out[:, :4 * W] = M
    out[:, 4 * W] = 1.0                  # total-sum (volume) column
    return jnp.asarray(out, dtype=jnp.bfloat16)   # 0/1 values: exact in bf16


# ------------------------------------ fused kernel ------------------------------------
def _wseg3d_kernel(pred_ref, lab_ref, m2_ref, out_ref, acc_ref, lhs_ref,
                   *, C, W, eps, w_diag):
    k = pl.program_id(1)
    nk = pl.num_programs(1)

    @pl.when(k == 0)
    def _init():
        acc_ref[...] = jnp.zeros_like(acc_ref)

    # ---- stage 1 (per HW tile): softmax over C, one-hot from labels, mean over D ----
    x = pred_ref[...].astype(jnp.float32)                     # [C, D, hw]
    mx = jnp.max(x, axis=0, keepdims=True)
    e = jnp.exp(x - mx)
    inv = pl.reciprocal(jnp.sum(e, axis=0, keepdims=True), approx=False)
    p = jnp.mean(e * inv, axis=1)                             # [C, hw]

    lab = lab_ref[...]                                        # [D, hw] int32
    cls = lax.broadcasted_iota(jnp.int32, x.shape, 0)         # [C, D, hw]
    t = jnp.mean((lab[None, :, :] == cls).astype(jnp.float32), axis=1)   # [C, hw]

    # ---- stage 2 partial: one stacked matmul does projections + cumsum + volume ----
    qp = 1.0 - p
    qt = 1.0 - t
    lhs_ref[0 * C:1 * C, :] = p * t
    lhs_ref[1 * C:2 * C, :] = t
    lhs_ref[2 * C:3 * C, :] = qp * qt
    lhs_ref[3 * C:4 * C, :] = qt

    m2 = m2_ref[...].astype(jnp.float32)                      # [hw, R]
    acc_ref[...] += jnp.dot(lhs_ref[...], m2,
                            preferred_element_type=jnp.float32)   # [4C, R]

    # ---- finalize this batch element on the last HW tile ----
    @pl.when(k == nk - 1)
    def _fini():
        a = acc_ref[...]                                      # [4C, R]
        R = a.shape[-1]
        col = lax.broadcasted_iota(jnp.int32, (1, R), 1)
        vol_col = (col == 4 * W).astype(jnp.float32)
        w_col = jnp.where(col < 2 * W, 1.0,
                          jnp.where(col < 4 * W, w_diag, 0.0)).astype(jnp.float32)

        total = jnp.sum(a * vol_col, axis=-1, keepdims=True)  # [4C, 1]
        vol = total * (1.0 / float(W)) + eps
        dist = a * pl.reciprocal(vol * float(W), approx=False)  # [4C, R]

        d_pt = dist[0 * C:1 * C]
        d_t = dist[1 * C:2 * C]
        d_qq = dist[2 * C:3 * C]
        d_qt = dist[3 * C:4 * C]
        pdist = jnp.sum(w_col * (jnp.abs(d_pt - d_t) + jnp.abs(d_qq - d_qt)))
        preg = jnp.sum(jnp.abs(vol[2 * C:3 * C] - vol[3 * C:4 * C]))

        rr = lax.broadcasted_iota(jnp.int32, (8, 128), 0)
        cc = lax.broadcasted_iota(jnp.int32, (8, 128), 1)
        out_ref[...] = (jnp.where((rr == 0) & (cc == 0), pdist, 0.0)
                        + jnp.where((rr == 0) & (cc == 1), preg, 0.0))


# -------------------------------------- wrapper --------------------------------------
def wseg3d_loss(predict, target, *, div_eps=0.5, alpha=0.1, block_hw=None):
    """predict: [N, C, D, H, W] logits (any float dtype); target: integer labels
    [N, D, H, W] (or [N, 1, D, H, W]), or a same-shape one-hot tensor."""
    N, C, D, H, W = predict.shape
    assert H == W, "H must equal W for the distance calculation"
    HW = H * W

    # TODO(synk): a same-shape *soft* target is approximated by argmax; the standard
    # nnU-Net path passes integer labels, which is what the kernel consumes directly.
    if target.ndim == predict.ndim and tuple(target.shape) == tuple(predict.shape):
        labels = jnp.argmax(target, axis=1)
    else:
        labels = target.reshape(N, D, H, W)
    labels = labels.reshape(N, D, HW).astype(jnp.int32)

    predf = predict.reshape(N, C, D, HW)          # keep HBM dtype; cast in-kernel

    # HW tile: multiple of 128 lanes (or the full plane when HW % 128 != 0).
    if block_hw is not None:
        hw_t = block_hw
    elif HW % 128 == 0:
        hw_t = 128
        for cand in (2048, 1024, 512, 256):
            if HW % cand == 0:
                hw_t = cand
                break
    else:
        hw_t = HW
    assert HW % hw_t == 0 and (hw_t == HW or hw_t % 128 == 0)
    K = HW // hw_t

    R = ((4 * W + 1 + 127) // 128) * 128
    m2 = _build_m2(H, W, R)

    kernel = functools.partial(_wseg3d_kernel, C=C, W=W, eps=float(div_eps),
                               w_diag=float(math.sqrt(0.5)))
    parts = pl.pallas_call(
        kernel,
        out_shape=jax.ShapeDtypeStruct((N, 8, 128), jnp.float32),
        grid=(N, K),
        in_specs=[
            pl.BlockSpec((None, C, D, hw_t), lambda n, k: (n, 0, 0, k)),
            pl.BlockSpec((None, D, hw_t), lambda n, k: (n, 0, k)),
            pl.BlockSpec((hw_t, R), lambda n, k: (k, 0)),
        ],
        out_specs=pl.BlockSpec((None, 8, 128), lambda n, k: (n, 0, 0)),
        scratch_shapes=[
            pltpu.VMEM((4 * C, R), jnp.float32),      # cumulative projections
            pltpu.VMEM((4 * C, hw_t), jnp.float32),   # stacked matmul LHS staging
        ],
        compiler_params=pltpu.CompilerParams(
            dimension_semantics=("parallel", "arbitrary")),
    )(predf, labels, m2)

    dist_sum = jnp.sum(parts[:, 0, 0])
    reg_sum = jnp.sum(parts[:, 0, 1])
    return dist_sum / float(N * C * W) + alpha * reg_sum / float(N * C)


# ----------------------- pure-numpy reference for verification -----------------------
def _reference_loss(pred5, tgt5, *, div_eps, alpha):
    pred5 = pred5.astype(np.float64)
    tgt5 = tgt5.astype(np.float64)
    e = np.exp(pred5 - pred5.max(axis=1, keepdims=True))
    sm = e / e.sum(axis=1, keepdims=True)
    p = sm.mean(axis=2)
    t = tgt5.mean(axis=2)
    H, W = p.shape[-2:]

    def sum_two(x):
        return x.sum(-1), x.sum(-2)

    def diag_two(x):
        dx = np.stack([sum(x[..., h, (h + k) % W] for h in range(H)) for k in range(W)], -1)
        dy = np.stack([sum(x[..., h, (h - k) % W] for h in range(H)) for k in range(W)], -1)
        return dx, dy

    def get_dist(func, x):
        ix, iy = func(x)
        n = ix.shape[-1]
        ix, iy = ix / n, iy / n
        vol = ix.sum(-1, keepdims=True) + div_eps
        return np.cumsum(ix, -1) / vol, np.cumsum(iy, -1) / vol, vol[..., 0]

    l1 = lambda a, b: np.mean(np.abs(a - b))
    funcs = [sum_two, diag_two]
    weights = [1.0, np.sqrt(0.5)]
    dist_loss = 0.0
    for f, w in zip(funcs, weights):
        dpx, dpy, _ = get_dist(f, p * t)
        dtx, dty, _ = get_dist(f, t)
        dist_loss += w * (l1(dpx, dtx) + l1(dpy, dty))
    for f, w in zip(funcs, weights):
        dpx, dpy, vp = get_dist(f, (1 - p) * (1 - t))
        dtx, dty, vt = get_dist(f, 1 - t)
        dist_loss += w * (l1(dpx, dtx) + l1(dpy, dty))
    return dist_loss + alpha * l1(vp, vt)


if __name__ == "__main__":
    N, C, D, H, W = 2, 4, 8, 16, 16
    key = jax.random.PRNGKey(0)
    k1, k2 = jax.random.split(key)
    predict = jax.random.normal(k1, (N, C, D, H, W), jnp.float32)      # logits
    labels = jax.random.randint(k2, (N, D, H, W), 0, C)                # integer label map

    # block_hw=128 -> two HW tiles, exercising the in-kernel accumulation path.
    loss = wseg3d_loss(predict, labels, div_eps=0.5, alpha=0.1, block_hw=128)
    loss = jax.block_until_ready(loss)

    onehot = np.asarray(jax.nn.one_hot(labels, C, axis=1, dtype=jnp.float32))
    ref = _reference_loss(np.asarray(predict), onehot, div_eps=0.5, alpha=0.1)
    assert abs(float(loss) - float(ref)) < 1e-3, (float(loss), float(ref))
    print("KERNEL_OK")
</pallas_src>

<mosaic_0001>
module attributes {stable_mosaic.version = 11 : i64} {
  func.func @_wseg3d_kernel(%arg0: i32, %arg1: i32, %arg2: memref<1x4x8x128xf32, #tpu.memory_space<vmem>>, %arg3: memref<1x8x128xi32, #tpu.memory_space<vmem>>, %arg4: memref<128x128xbf16, #tpu.memory_space<vmem>>, %arg5: memref<1x8x128xf32, #tpu.memory_space<vmem>>, %arg6: memref<16x128xf32, #tpu.memory_space<vmem>>, %arg7: memref<16x128xf32, #tpu.memory_space<vmem>>) attributes {dimension_semantics = [#tpu.dimension_semantics<parallel>, #tpu.dimension_semantics<arbitrary>], iteration_bounds = array<i64: 2, 2>, scalar_prefetch = 0 : i64, scratch_operands = 2 : i64, tpu.core_type = #tpu.core_type<tc>, window_params = [{transform_indices = @transform_0, window_bounds = array<i64: 1, 4, 8, 128>}, {transform_indices = @transform_1, window_bounds = array<i64: 1, 8, 128>}, {transform_indices = @transform_2, window_bounds = array<i64: 128, 128>}, {transform_indices = @transform_3, window_bounds = array<i64: 1, 8, 128>}]} {
    %c0_i32 = arith.constant 0 : i32
    %0 = arith.cmpi eq, %arg1, %c0_i32 : i32
    %1 = arith.extui %0 : i1 to i32
    %c0_i32_0 = arith.constant 0 : i32
    %2 = arith.cmpi ne, %1, %c0_i32_0 : i32
    scf.if %2 {
      %cst_29 = arith.constant 0.000000e+00 : f32
      %49 = vector.broadcast %cst_29 : f32 to vector<16x128xf32>
      %c0_30 = arith.constant 0 : index
      %c0_31 = arith.constant 0 : index
      %50 = vector.load %arg6[%c0_30, %c0_31] : memref<16x128xf32, #tpu.memory_space<vmem>>, vector<16x128xf32>
      tpu.vector_store %arg6[%c0_30, %c0_31], %49 {strides = array<i32>} : memref<16x128xf32, #tpu.memory_space<vmem>>, vector<16x128xf32>,
    } else {
    }
    %c0 = arith.constant 0 : index
    %c0_1 = arith.constant 0 : index
    %c0_2 = arith.constant 0 : index
    %c0_3 = arith.constant 0 : index
    %3 = vector.load %arg2[%c0, %c0_1, %c0_2, %c0_3] : memref<1x4x8x128xf32, #tpu.memory_space<vmem>>, vector<1x4x8x128xf32>
    %4 = vector.shape_cast %3 : vector<1x4x8x128xf32> to vector<4x8x128xf32>
    %cst = arith.constant dense<0xFF800000> : vector<8x128xf32>
    %5 = vector.multi_reduction <maximumf>, %4, %cst [0] : vector<4x8x128xf32> to vector<8x128xf32>
    %6 = vector.shape_cast %5 : vector<8x128xf32> to vector<1x8x128xf32>
    %7 = vector.broadcast %6 : vector<1x8x128xf32> to vector<4x8x128xf32>
    %8 = arith.subf %4, %7 : vector<4x8x128xf32>
    %9 = math.exp %8 : vector<4x8x128xf32>
    %cst_4 = arith.constant dense<0.000000e+00> : vector<8x128xf32>
    %10 = vector.multi_reduction <add>, %9, %cst_4 [0] : vector<4x8x128xf32> to vector<8x128xf32>
    %11 = vector.shape_cast %10 : vector<8x128xf32> to vector<1x8x128xf32>
    %12 = tpu.reciprocal %11 : vector<1x8x128xf32> -> vector<1x8x128xf32>
    %13 = vector.broadcast %12 : vector<1x8x128xf32> to vector<4x8x128xf32>
    %14 = arith.mulf %9, %13 : vector<4x8x128xf32>
    %cst_5 = arith.constant dense<0.000000e+00> : vector<4x128xf32>
    %15 = vector.multi_reduction <add>, %14, %cst_5 [1] : vector<4x8x128xf32> to vector<4x128xf32>
    %cst_6 = arith.constant 8.000000e+00 : f32
    %16 = vector.broadcast %cst_6 : f32 to vector<4x128xf32>
    %17 = arith.divf %15, %16 : vector<4x128xf32>
    %c0_7 = arith.constant 0 : index
    %c0_8 = arith.constant 0 : index
    %c0_9 = arith.constant 0 : index
    %18 = vector.load %arg3[%c0_7, %c0_8, %c0_9] : memref<1x8x128xi32, #tpu.memory_space<vmem>>, vector<1x8x128xi32>
    %19 = vector.shape_cast %18 : vector<1x8x128xi32> to vector<8x128xi32>
    %20 = tpu.iota {dimensions = array<i32: 0>} : vector<4x8x128xi32>
    %21 = vector.shape_cast %19 : vector<8x128xi32> to vector<1x8x128xi32>
    %22 = vector.broadcast %21 : vector<1x8x128xi32> to vector<4x8x128xi32>
    %23 = arith.cmpi eq, %22, %20 : vector<4x8x128xi32>
    %24 = arith.extui %23 : vector<4x8x128xi1> to vector<4x8x128xi32>
    %25 = arith.sitofp %24 : vector<4x8x128xi32> to vector<4x8x128xf32>
    %cst_10 = arith.constant dense<0.000000e+00> : vector<4x128xf32>
    %26 = vector.multi_reduction <add>, %25, %cst_10 [1] : vector<4x8x128xf32> to vector<4x128xf32>
    %cst_11 = arith.constant 8.000000e+00 : f32
    %27 = vector.broadcast %cst_11 : f32 to vector<4x128xf32>
    %28 = arith.divf %26, %27 : vector<4x128xf32>
    %cst_12 = arith.constant 1.000000e+00 : f32
    %29 = vector.broadcast %cst_12 : f32 to vector<4x128xf32>
    %30 = arith.subf %29, %17 : vector<4x128xf32>
    %cst_13 = arith.constant 1.000000e+00 : f32
    %31 = vector.broadcast %cst_13 : f32 to vector<4x128xf32>
    %32 = arith.subf %31, %28 : vector<4x128xf32>
    %33 = arith.mulf %17, %28 : vector<4x128xf32>
    %c0_14 = arith.constant 0 : index
    %c0_15 = arith.constant 0 : index
    %34 = vector.load %arg7[%c0_14, %c0_15] : memref<16x128xf32, #tpu.memory_space<vmem>>, vector<4x128xf32>
    tpu.vector_store %arg7[%c0_14, %c0_15], %33 {strides = array<i32>} : memref<16x128xf32, #tpu.memory_space<vmem>>, vector<4x128xf32>,
    %c4 = arith.constant 4 : index
    %c0_16 = arith.constant 0 : index
    %35 = vector.load %arg7[%c4, %c0_16] : memref<16x128xf32, #tpu.memory_space<vmem>>, vector<4x128xf32>
    tpu.vector_store %arg7[%c4, %c0_16], %28 {strides = array<i32>} : memref<16x128xf32, #tpu.memory_space<vmem>>, vector<4x128xf32>,
    %36 = arith.mulf %30, %32 : vector<4x128xf32>
    %c8 = arith.constant 8 : index
    %c0_17 = arith.constant 0 : index
    %37 = vector.load %arg7[%c8, %c0_17] : memref<16x128xf32, #tpu.memory_space<vmem>>, vector<4x128xf32>
    tpu.vector_store %arg7[%c8, %c0_17], %36 {strides = array<i32>} : memref<16x128xf32, #tpu.memory_space<vmem>>, vector<4x128xf32>,
    %c12 = arith.constant 12 : index
    %c0_18 = arith.constant 0 : index
    %38 = vector.load %arg7[%c12, %c0_18] : memref<16x128xf32, #tpu.memory_space<vmem>>, vector<4x128xf32>
    tpu.vector_store %arg7[%c12, %c0_18], %32 {strides = array<i32>} : memref<16x128xf32, #tpu.memory_space<vmem>>, vector<4x128xf32>,
    %c0_19 = arith.constant 0 : index
    %c0_20 = arith.constant 0 : index
    %39 = vector.load %arg4[%c0_19, %c0_20] : memref<128x128xbf16, #tpu.memory_space<vmem>>, vector<128x128xbf16>
    %40 = arith.extf %39 : vector<128x128xbf16> to vector<128x128xf32>
    %c0_21 = arith.constant 0 : index
    %c0_22 = arith.constant 0 : index
    %41 = vector.load %arg6[%c0_21, %c0_22] : memref<16x128xf32, #tpu.memory_space<vmem>>, vector<16x128xf32>
    %c0_23 = arith.constant 0 : index
    %c0_24 = arith.constant 0 : index
    %42 = vector.load %arg7[%c0_23, %c0_24] : memref<16x128xf32, #tpu.memory_space<vmem>>, vector<16x128xf32>
    %cst_25 = arith.constant dense<0.000000e+00> : vector<16x128xf32>
    %43 = tpu.matmul %42, %40, %cst_25 {dimension_numbers = #tpu.dot_dimension_numbers<[1], [0], [0], [1], [0, 0, 1, 1], [], []>} : vector<16x128xf32>, vector<128x128xf32>, vector<16x128xf32> -> vector<16x128xf32>
    %44 = arith.addf %41, %43 : vector<16x128xf32>
    %c0_26 = arith.constant 0 : index
    %c0_27 = arith.constant 0 : index
    %45 = vector.load %arg6[%c0_26, %c0_27] : memref<16x128xf32, #tpu.memory_space<vmem>>, vector<16x128xf32>
    tpu.vector_store %arg6[%c0_26, %c0_27], %44 {strides = array<i32>} : memref<16x128xf32, #tpu.memory_space<vmem>>, vector<16x128xf32>,
    %c1_i32 = arith.constant 1 : i32
    %46 = arith.cmpi eq, %arg1, %c1_i32 : i32
    %47 = arith.extui %46 : i1 to i32
    %c0_i32_28 = arith.constant 0 : i32
    %48 = arith.cmpi ne, %47, %c0_i32_28 : i32
    scf.if %48 {
      %c0_29 = arith.constant 0 : index
      %c0_30 = arith.constant 0 : index
      %49 = vector.load %arg6[%c0_29, %c0_30] : memref<16x128xf32, #tpu.memory_space<vmem>>, vector<16x128xf32>
      %50 = tpu.iota {dimensions = array<i32: 1>} : vector<1x128xi32>
      %c64_i32 = arith.constant 64 : i32
      %51 = vector.broadcast %c64_i32 : i32 to vector<1x128xi32>
      %52 = arith.cmpi eq, %50, %51 : vector<1x128xi32>
      %53 = arith.extui %52 : vector<1x128xi1> to vector<1x128xi32>
      %54 = arith.sitofp %53 : vector<1x128xi32> to vector<1x128xf32>
      %c32_i32 = arith.constant 32 : i32
      %55 = vector.broadcast %c32_i32 : i32 to vector<1x128xi32>
      %56 = arith.cmpi slt, %50, %55 : vector<1x128xi32>
      %c64_i32_31 = arith.constant 64 : i32
      %57 = vector.broadcast %c64_i32_31 : i32 to vector<1x128xi32>
      %58 = arith.cmpi slt, %50, %57 : vector<1x128xi32>
      %cst_32 = arith.constant 0.707106769 : f32
      %cst_33 = arith.constant 0.000000e+00 : f32
      %59 = vector.broadcast %cst_32 : f32 to vector<1x128xf32>
      %60 = vector.broadcast %cst_33 : f32 to vector<1x128xf32>
      %61 = arith.select %58, %59, %60 : vector<1x128xi1>, vector<1x128xf32>
      %cst_34 = arith.constant 1.000000e+00 : f32
      %62 = vector.broadcast %cst_34 : f32 to vector<1x128xf32>
      %63 = arith.select %56, %62, %61 : vector<1x128xi1>, vector<1x128xf32>
      %64 = vector.broadcast %54 : vector<1x128xf32> to vector<16x128xf32>
      %65 = arith.mulf %49, %64 : vector<16x128xf32>
      %cst_35 = arith.constant dense<0.000000e+00> : vector<16xf32>
      %66 = vector.multi_reduction <add>, %65, %cst_35 [1] : vector<16x128xf32> to vector<16xf32>
      %67 = vector.shape_cast %66 : vector<16xf32> to vector<16x1xf32>
      %cst_36 = arith.constant 6.250000e-02 : f32
      %68 = vector.broadcast %cst_36 : f32 to vector<16x1xf32>
      %69 = arith.mulf %67, %68 : vector<16x1xf32>
      %cst_37 = arith.constant 5.000000e-01 : f32
      %70 = vector.broadcast %cst_37 : f32 to vector<16x1xf32>
      %71 = arith.addf %69, %70 : vector<16x1xf32>
      %cst_38 = arith.constant 1.600000e+01 : f32
      %72 = vector.broadcast %cst_38 : f32 to vector<16x1xf32>
      %73 = arith.mulf %71, %72 : vector<16x1xf32>
      %74 = tpu.reciprocal %73 : vector<16x1xf32> -> vector<16x1xf32>
      %75 = vector.broadcast %74 : vector<16x1xf32> to vector<16x128xf32>
      %76 = arith.mulf %49, %75 : vector<16x128xf32>
      %77 = vector.extract_strided_slice %76 {offsets = [0, 0], sizes = [4, 128], strides = [1, 1]} : vector<16x128xf32> to vector<4x128xf32>
      %78 = vector.extract_strided_slice %76 {offsets = [4, 0], sizes = [4, 128], strides = [1, 1]} : vector<16x128xf32> to vector<4x128xf32>
      %79 = vector.extract_strided_slice %76 {offsets = [8, 0], sizes = [4, 128], strides = [1, 1]} : vector<16x128xf32> to vector<4x128xf32>
      %80 = vector.extract_strided_slice %76 {offsets = [12, 0], sizes = [4, 128], strides = [1, 1]} : vector<16x128xf32> to vector<4x128xf32>
      %81 = arith.subf %77, %78 : vector<4x128xf32>
      %82 = math.absf %81 : vector<4x128xf32>
      %83 = arith.subf %79, %80 : vector<4x128xf32>
      %84 = math.absf %83 : vector<4x128xf32>
      %85 = arith.addf %82, %84 : vector<4x128xf32>
      %86 = vector.broadcast %63 : vector<1x128xf32> to vector<4x128xf32>
      %87 = arith.mulf %86, %85 : vector<4x128xf32>
      %88 = vector.shape_cast %87 : vector<4x128xf32> to vector<1x4x128xf32>
      %cst_39 = arith.constant dense<0.000000e+00> : vector<1xf32>
      %89 = vector.multi_reduction <add>, %88, %cst_39 [1, 2] : vector<1x4x128xf32> to vector<1xf32>
      %90 = vector.shape_cast %89 : vector<1xf32> to vector<1x1x1xf32>
      %91 = vector.extract %90[0, 0, 0] : f32 from vector<1x1x1xf32>
      %92 = vector.extract_strided_slice %71 {offsets = [8, 0], sizes = [4, 1], strides = [1, 1]} : vector<16x1xf32> to vector<4x1xf32>
      %93 = vector.extract_strided_slice %71 {offsets = [12, 0], sizes = [4, 1], strides = [1, 1]} : vector<16x1xf32> to vector<4x1xf32>
      %94 = arith.subf %92, %93 : vector<4x1xf32>
      %95 = math.absf %94 : vector<4x1xf32>
      %96 = vector.shape_cast %95 : vector<4x1xf32> to vector<1x4x1xf32>
      %cst_40 = arith.constant dense<0.000000e+00> : vector<1xf32>
      %97 = vector.multi_reduction <add>, %96, %cst_40 [1, 2] : vector<1x4x1xf32> to vector<1xf32>
      %98 = vector.shape_cast %97 : vector<1xf32> to vector<1x1x1xf32>
      %99 = vector.extract %98[0, 0, 0] : f32 from vector<1x1x1xf32>
      %100 = tpu.iota {dimensions = array<i32: 0>} : vector<8x128xi32>
      %101 = tpu.iota {dimensions = array<i32: 1>} : vector<8x128xi32>
      %c0_i32_41 = arith.constant 0 : i32
      %102 = vector.broadcast %c0_i32_41 : i32 to vector<8x128xi32>
      %103 = arith.cmpi eq, %100, %102 : vector<8x128xi32>
      %c0_i32_42 = arith.constant 0 : i32
      %104 = vector.broadcast %c0_i32_42 : i32 to vector<8x128xi32>
      %105 = arith.cmpi eq, %101, %104 : vector<8x128xi32>
      %106 = arith.andi %103, %105 : vector<8x128xi1>
      %cst_43 = arith.constant 0.000000e+00 : f32
      %107 = vector.broadcast %91 : f32 to vector<8x128xf32>
      %108 = vector.broadcast %cst_43 : f32 to vector<8x128xf32>
      %109 = arith.select %106, %107, %108 : vector<8x128xi1>, vector<8x128xf32>
      %c0_i32_44 = arith.constant 0 : i32
      %110 = vector.broadcast %c0_i32_44 : i32 to vector<8x128xi32>
      %111 = arith.cmpi eq, %100, %110 : vector<8x128xi32>
      %c1_i32_45 = arith.constant 1 : i32
      %112 = vector.broadcast %c1_i32_45 : i32 to vector<8x128xi32>
      %113 = arith.cmpi eq, %101, %112 : vector<8x128xi32>
      %114 = arith.andi %111, %113 : vector<8x128xi1>
      %cst_46 = arith.constant 0.000000e+00 : f32
      %115 = vector.broadcast %99 : f32 to vector<8x128xf32>
      %116 = vector.broadcast %cst_46 : f32 to vector<8x128xf32>
      %117 = arith.select %114, %115, %116 : vector<8x128xi1>, vector<8x128xf32>
      %118 = arith.addf %109, %117 : vector<8x128xf32>
      %c0_47 = arith.constant 0 : index
      %c0_48 = arith.constant 0 : index
      %c0_49 = arith.constant 0 : index
      %119 = vector.load %arg5[%c0_47, %c0_48, %c0_49] : memref<1x8x128xf32, #tpu.memory_space<vmem>>, vector<1x8x128xf32>
      %120 = vector.shape_cast %119 : vector<1x8x128xf32> to vector<8x128xf32>
      %121 = vector.shape_cast %118 : vector<8x128xf32> to vector<1x8x128xf32>
      tpu.vector_store %arg5[%c0_47, %c0_48, %c0_49], %121 {strides = array<i32>} : memref<1x8x128xf32, #tpu.memory_space<vmem>>, vector<1x8x128xf32>,
    } else {
    }
    return
  }
  func.func @transform_0(%arg0: i32, %arg1: i32) -> (i32, i32, i32, i32) {
    %c0_i32 = arith.constant 0 : i32
    %c0_i32_0 = arith.constant 0 : i32
    %c0_i32_1 = arith.constant 0 : i32
    return %arg0, %c0_i32, %c0_i32_0, %arg1 : i32, i32, i32, i32
  }
  func.func @transform_1(%arg0: i32, %arg1: i32) -> (i32, i32, i32) {
    %c0_i32 = arith.constant 0 : i32
    %c0_i32_0 = arith.constant 0 : i32
    return %arg0, %c0_i32, %arg1 : i32, i32, i32
  }
  func.func @transform_2(%arg0: i32, %arg1: i32) -> (i32, i32) {
    %c0_i32 = arith.constant 0 : i32
    %c0_i32_0 = arith.constant 0 : i32
    return %arg1, %c0_i32 : i32, i32
  }
  func.func @transform_3(%arg0: i32, %arg1: i32) -> (i32, i32, i32) {
    %c0_i32 = arith.constant 0 : i32
    %c0_i32_0 = arith.constant 0 : i32
    %c0_i32_1 = arith.constant 0 : i32
    return %arg0, %c0_i32, %c0_i32_0 : i32, i32, i32
  }
}

</mosaic_0001>

<llo_original>
// kernel: tpu_custom_call.1
$region0: #{tpu_custom_call.1}
  #allocation0 [shape = 'u32[]', space=smem, size = 0x4, offset = 0x4, fixed_abs, tag = 'smem constant byte address 0x4 - core index']
  #allocation1 [shape = 'u32[144,128]{1,0:T(1,128)}', space=vmem, size = 0x12000, scoped, tag = 'internal scratch']
  #allocation2 [shape = 'f32[16,128]{1,0:T(8,128)}', space=vmem, size = 0x2000, scoped, tag = 'scratch operand']
  #allocation3 [shape = 'f32[16,128]{1,0:T(8,128)}', space=vmem, size = 0x2000, scoped, tag = 'scratch operand']
  %s0 = inlined_call_operand.hbm [shape: f32[2,4,8,256], index: 0, kind: input, shape index: {}]
  %s1 = inlined_call_operand.hbm [shape: s32[2,8,256], index: 1, kind: input, shape index: {}]
  %s2 = inlined_call_operand.hbm [shape: bf16[256,128], index: 2, kind: input, shape index: {}]
  %s3 = inlined_call_operand.hbm [shape: f32[2,8,128], index: 3, kind: output, shape index: {}]
  %s4 = sld [smem:[#allocation0]]
  $region65: #{tpu_custom_call.1} parent=0
    _
  %s6 = ssub.s32 1, %s4
  %s7 = scalar_select 0, %s6, %s4
  $region1: #{tpu_custom_call.1} parent=0
    #allocation4 [shape = 'u8[32768]{0}', space=vmem, size = 0x8000, scoped, tag = 'input window, operand 0']
    #allocation5 [shape = 's32[2]{0}', space=sflag, size = 0x8, scoped, tag = 'scoped memory for tpu_custom_call.1']
    #allocation6 [shape = 's32[2]{0}', space=sflag, size = 0x8, scoped, tag = 'scoped memory for tpu_custom_call.1']
    #allocation7 [shape = 'u8[8192]{0}', space=vmem, size = 0x2000, scoped, tag = 'input window, operand 1']
    #allocation8 [shape = 's32[2]{0}', space=sflag, size = 0x8, scoped, tag = 'scoped memory for tpu_custom_call.1']
    #allocation9 [shape = 'u8[65536]{0}', space=vmem, size = 0x10000, scoped, tag = 'input window, operand 2']
    #allocation10 [shape = 'u8[8192]{0}', space=vmem, size = 0x2000, scoped, tag = 'output window, operand 0']
    %8 = vsyncpa [#allocation5], 0
    %s9 = scalar_lea.sflag [#allocation5], 1
    %10 = vsyncpa %s9, 0
    %11 = vsyncpa [#allocation8], 0
    %s12 = scalar_lea.sflag [#allocation8], 1
    %13 = vsyncpa %s12, 0
    %14 = vsyncpa [#allocation6], 0
    %s15 = scalar_lea.sflag [#allocation6], 1
    %16 = vsyncpa %s15, 0
    loop: start=0, step=1, limit=6
    $region2: #{tpu_custom_call.1} parent=1 // loop_pre_header
      _
    $region3: #{tpu_custom_call.1} parent=1 // loop_header
      %s18 = sphi 0, %s22
      %p19 = scmp.ge.s32.totalorder %s18, 6
      %s25 = sphi 0, %s37
      %s26 = sphi 0, %s33
      %s27 = sphi 0, %s25
      %s28 = sphi 0, %s26
      %s29 = sphi 0, %s27
      %s30 = sphi 0, %s28
      %s42 = sphi 0, %s44
      %s45 = sphi 0, %s42
      %s46 = sphi 0, %s45
      %s62 = sphi 0, %s46
      %s70 = sphi 0, %s72
      %s73 = sphi 0, %s70
      %s74 = sphi 0, %s73
      %s90 = sphi 0, %s74
      %s96 = sphi 0, %s98
      %s99 = sphi 0, %s96
      %s100 = sphi 0, %s99
      %s116 = sphi 0, %s100
      %s122 = sphi 0, %s124
      %s125 = sphi 0, %s122
      %s126 = sphi 0, %s125
      %s142 = sphi 0, %s126
    $region4: #{tpu_custom_call.1} parent=1 // loop_header_branch
      %21 = sbr.rel (%p19) target = $region8
    $region5: #{tpu_custom_call.1} parent=1 // loop_body
      %s23 = ssub.s32 %s18, 1
      %s24 = ssub.s32 %s18, 2
      %s31 = sadd.s32 1, %s26
      %p32 = scmp.ge.s32.totalorder %s31, 2
      %s33 = scalar_select %p32, 0, %s31
      %s34 = sadd.s32 1, %s25
      %s35 = scalar_select %p32, %s34, %s25
      %p36 = scmp.ge.s32.totalorder %s35, 2
      %s37 = scalar_select %p36, 0, %s35
      %s38 = ssub.s32 %s25, %s37
      %s39 = ssub.s32 %s26, %s33
      %s40 = sor.u32 %s38, %s39
      %p41 = scmp.eq.s32.totalorder %s40, 0
      %s43 = sadd.s32 %s42, 1
      %s44 = scalar_select %p41, %s42, %s43
      %p47 = pneg %p41
      %p48 = scmp.eq.s32.totalorder %s18, 3
      %p49 = por %p47, %p48
      %p50 = scmp.ne.s32.totalorder %s42, %s45
      %p51 = scmp.eq.s32.totalorder %s18, 0
      %p52 = por %p50, %p51
      %p53 = scmp.ne.s32.totalorder %s42, %s45
      %p54 = scmp.eq.s32.totalorder %s23, 3
      %p55 = por %p53, %p54
      %p56 = scmp.ne.s32.totalorder %s45, %s46
      %p57 = scmp.eq.s32.totalorder %s23, 0
      %p58 = por %p56, %p57
      %p59 = scmp.ne.s32.totalorder %s45, %s46
      %p60 = scmp.eq.s32.totalorder %s24, 3
      %p61 = por %p59, %p60
      %p63 = scmp.ne.s32.totalorder %s46, %s62
      %p64 = scmp.eq.s32.totalorder %s24, 0
      %p65 = por %p63, %p64
      %s66 = ssub.s32 %s25, %s37
      %s67 = ssub.s32 %s26, %s33
      %s68 = sor.u32 %s66, %s67
      %p69 = scmp.eq.s32.totalorder %s68, 0
      %s71 = sadd.s32 %s70, 1
      %s72 = scalar_select %p69, %s70, %s71
      %p75 = pneg %p69
      %p76 = scmp.eq.s32.totalorder %s18, 3
      %p77 = por %p75, %p76
      %p78 = scmp.ne.s32.totalorder %s70, %s73
      %p79 = scmp.eq.s32.totalorder %s18, 0
      %p80 = por %p78, %p79
      %p81 = scmp.ne.s32.totalorder %s70, %s73
      %p82 = scmp.eq.s32.totalorder %s23, 3
      %p83 = por %p81, %p82
      %p84 = scmp.ne.s32.totalorder %s73, %s74
      %p85 = scmp.eq.s32.totalorder %s23, 0
      %p86 = por %p84, %p85
      %p87 = scmp.ne.s32.totalorder %s73, %s74
      %p88 = scmp.eq.s32.totalorder %s24, 3
      %p89 = por %p87, %p88
      %p91 = scmp.ne.s32.totalorder %s74, %s90
      %p92 = scmp.eq.s32.totalorder %s24, 0
      %p93 = por %p91, %p92
      %s94 = ssub.s32 %s26, %s33
      %p95 = scmp.eq.s32.totalorder %s94, 0
      %s97 = sadd.s32 %s96, 1
      %s98 = scalar_select %p95, %s96, %s97
      %p101 = pneg %p95
      %p102 = scmp.eq.s32.totalorder %s18, 3
      %p103 = por %p101, %p102
      %p104 = scmp.ne.s32.totalorder %s96, %s99
      %p105 = scmp.eq.s32.totalorder %s18, 0
      %p106 = por %p104, %p105
      %p107 = scmp.ne.s32.totalorder %s96, %s99
      %p108 = scmp.eq.s32.totalorder %s23, 3
      %p109 = por %p107, %p108
      %p110 = scmp.ne.s32.totalorder %s99, %s100
      %p111 = scmp.eq.s32.totalorder %s23, 0
      %p112 = por %p110, %p111
      %p113 = scmp.ne.s32.totalorder %s99, %s100
      %p114 = scmp.eq.s32.totalorder %s24, 3
      %p115 = por %p113, %p114
      %p117 = scmp.ne.s32.totalorder %s100, %s116
      %p118 = scmp.eq.s32.totalorder %s24, 0
      %p119 = por %p117, %p118
      %s120 = ssub.s32 %s25, %s37
      %p121 = scmp.eq.s32.totalorder %s120, 0
      %s123 = sadd.s32 %s122, 1
      %s124 = scalar_select %p121, %s122, %s123
      %p127 = pneg %p121
      %p128 = scmp.eq.s32.totalorder %s18, 3
      %p129 = por %p127, %p128
      %p130 = scmp.ne.s32.totalorder %s122, %s125
      %p131 = scmp.eq.s32.totalorder %s18, 0
      %p132 = por %p130, %p131
      %p133 = scmp.ne.s32.totalorder %s122, %s125
      %p134 = scmp.eq.s32.totalorder %s23, 3
      %p135 = por %p133, %p134
      %p136 = scmp.ne.s32.totalorder %s125, %s126
      %p137 = scmp.eq.s32.totalorder %s23, 0
      %p138 = por %p136, %p137
      %p139 = scmp.ne.s32.totalorder %s125, %s126
      %p140 = scmp.eq.s32.totalorder %s24, 3
      %p141 = por %p139, %p140
      %p143 = scmp.ne.s32.totalorder %s126, %s142
      %p144 = scmp.eq.s32.totalorder %s24, 0
      %p145 = por %p143, %p144
      %p146 = scmp.le.s32.totalorder 1, %s18
      %p147 = scmp.lt.s32.totalorder %s18, 5
      %p148 = pnand %p146, %p147
      %p149 = pneg %p148
      // Predicated region
      $region9: #{tpu_custom_call.1} parent=5 // pred_check
        _
      $region10: #{tpu_custom_call.1} parent=5 // pred_check_branch
        %151 = sbr.rel (%p148) target = $region12
      $region11: #{tpu_custom_call.1} parent=5 // pred_region
        %s152 = ssub.s32 %s18, 1
      $region12: #{tpu_custom_call.1} parent=5 // pred_fallthru
        _
      %p153 = scmp.lt.s32.totalorder %s18, 4
      // Predicated region
      $region13: #{tpu_custom_call.1} parent=5 // pred_check
        %p154 = pneg %p153
      $region14: #{tpu_custom_call.1} parent=5 // pred_check_branch
        %156 = sbr.rel (%p154) target = $region16
      $region15: #{tpu_custom_call.1} parent=5 // pred_region
        // Predicated region
        $region17: #{tpu_custom_call.1} parent=15 // pred_check
          %p157 = pneg %p52
        $region18: #{tpu_custom_call.1} parent=15 // pred_check_branch
          %159 = sbr.rel (%p157) target = $region20
        $region19: #{tpu_custom_call.1} parent=15 // pred_region
          %s160 = sand.u32 %s42, 1
          %s161 = scalar_lea.sflag [#allocation5], %s160
          %s162 = sand.u32 %s42, 1
          %s163 = smul.addr %s162, 32
          %s164 = scalar_lea.vmem [#allocation4], %s163
          %s166 = ssub.s32 512, 512
          %167 = vsyncadd %s161, %s166
          %s168 = smul.addr %s25, 8
          %s169 = sadd.s32 %s26, %s168
          %s170 = smul.addr %s169, 128
          %s171 = scalar_lea.hbm %s0, %s170
          %s172 = sshll.u32 %s164, 4
          %s173 = int_to_ptr.vmem [resolvable:$true] %s172
          %178 = dma.hbm_to_vmem [thread:$0]  %s171, 512, %s173, %s161, 256, 128, 8
        $region20: #{tpu_custom_call.1} parent=15 // pred_fallthru
          _
        // Predicated region
        $region21: #{tpu_custom_call.1} parent=15 // pred_check
          %p179 = pneg %p80
        $region22: #{tpu_custom_call.1} parent=15 // pred_check_branch
          %181 = sbr.rel (%p179) target = $region24
        $region23: #{tpu_custom_call.1} parent=15 // pred_region
          %s182 = sand.u32 %s18, 1
          %s183 = scalar_lea.sflag [#allocation8], %s182
          %s184 = sand.u32 %s70, 1
          %s185 = smul.addr %s184, 8
          %s186 = scalar_lea.vmem [#allocation7], %s185
          %s188 = ssub.s32 128, 128
          %189 = vsyncadd %s183, %s188
          %s190 = smul.addr %s25, 2
          %s191 = sadd.s32 %s26, %s190
          %s192 = smul.addr %s191, 128
          %s193 = scalar_lea.hbm %s1, %s192
          %s195 = sshll.u32 %s186, 4
          %s196 = int_to_ptr.vmem [resolvable:$true] %s195
          %198 = dma.hbm_to_vmem [thread:$0]  %s193, 128, %s196, %s183
        $region24: #{tpu_custom_call.1} parent=15 // pred_fallthru
          _
        // Predicated region
        $region25: #{tpu_custom_call.1} parent=15 // pred_check
          %p199 = pneg %p106
        $region26: #{tpu_custom_call.1} parent=15 // pred_check_branch
          %201 = sbr.rel (%p199) target = $region28
        $region27: #{tpu_custom_call.1} parent=15 // pred_region
          %s202 = sand.u32 %s18, 1
          %s203 = scalar_lea.sflag [#allocation8], %s202
          %s204 = sand.u32 %s96, 1
          %s205 = smul.addr %s204, 64
          %s206 = scalar_lea.vmem [#allocation9], %s205
          %s207 = smul.u32 16, %s26
          %s209 = ssub.s32 1024, 1024
          %210 = vsyncadd %s203, %s209
          %s211 = smul.addr %s207, 64
          %s212 = scalar_lea.hbm %s2, %s211
          %s213 = sshll.u32 %s206, 4
          %s214 = int_to_ptr.vmem [resolvable:$true] %s213
          %219 = dma.hbm_to_vmem [thread:$0]  %s212, 1024, %s214, %s203, 64, 64, 4
        $region28: #{tpu_custom_call.1} parent=15 // pred_fallthru
          _
      $region16: #{tpu_custom_call.1} parent=5 // pred_fallthru
        _
      %p220 = scmp.le.s32.totalorder 1, %s18
      %p221 = scmp.lt.s32.totalorder %s18, 5
      %p222 = pnand %p220, %p221
      %p223 = pneg %p222
      // Predicated region
      $region29: #{tpu_custom_call.1} parent=5 // pred_check
        _
      $region30: #{tpu_custom_call.1} parent=5 // pred_check_branch
        %225 = sbr.rel (%p222) target = $region32
      $region31: #{tpu_custom_call.1} parent=5 // pred_region
        %s226 = ssub.s32 %s18, 1
        %s227 = sand.u32 %s45, 1
        %s228 = scalar_lea.sflag [#allocation5], %s227
        %s229 = sand.u32 %s45, 1
        %s230 = smul.addr %s229, 32
        %s231 = scalar_lea.vmem [#allocation4], %s230
        // Predicated region
        $region33: #{tpu_custom_call.1} parent=31 // pred_check
          %p232 = pneg %p58
        $region34: #{tpu_custom_call.1} parent=31 // pred_check_branch
          %234 = sbr.rel (%p232) target = $region36
        $region35: #{tpu_custom_call.1} parent=31 // pred_region
          %235 = dma.done %s228, 512
        $region36: #{tpu_custom_call.1} parent=31 // pred_fallthru
          _
        %s236 = sand.u32 %s23, 1
        %s237 = scalar_lea.sflag [#allocation8], %s236
        %s238 = sand.u32 %s73, 1
        %s239 = smul.addr %s238, 8
        %s240 = scalar_lea.vmem [#allocation7], %s239
        // Predicated region
        $region37: #{tpu_custom_call.1} parent=31 // pred_check
          %p241 = pneg %p86
        $region38: #{tpu_custom_call.1} parent=31 // pred_check_branch
          %243 = sbr.rel (%p241) target = $region40
        $region39: #{tpu_custom_call.1} parent=31 // pred_region
          %244 = dma.done %s237, 128
        $region40: #{tpu_custom_call.1} parent=31 // pred_fallthru
          _
        %s245 = sand.u32 %s23, 1
        %s246 = scalar_lea.sflag [#allocation8], %s245
        %s247 = sand.u32 %s99, 1
        %s248 = smul.addr %s247, 64
        %s249 = scalar_lea.vmem [#allocation9], %s248
        // Predicated region
        $region41: #{tpu_custom_call.1} parent=31 // pred_check
          %p250 = pneg %p112
        $region42: #{tpu_custom_call.1} parent=31 // pred_check_branch
          %252 = sbr.rel (%p250) target = $region44
        $region43: #{tpu_custom_call.1} parent=31 // pred_region
          %253 = dma.done %s246, 1024
        $region44: #{tpu_custom_call.1} parent=31 // pred_fallthru
          _
        %s254 = sand.u32 %s45, 1
        %s255 = scalar_lea.sflag [#allocation5], %s254
        %s256 = sand.u32 %s45, 1
        %s257 = smul.addr %s256, 32
        %s258 = scalar_lea.vmem [#allocation4], %s257
        %p259 = pneg %p58
        %p260 = pneg %p55
        %s261 = sand.u32 %s23, 1
        %s262 = scalar_lea.sflag [#allocation8], %s261
        %s263 = sand.u32 %s73, 1
        %s264 = smul.addr %s263, 8
        %s265 = scalar_lea.vmem [#allocation7], %s264
        %p266 = pneg %p86
        %p267 = pneg %p83
        %s268 = sand.u32 %s23, 1
        %s269 = scalar_lea.sflag [#allocation8], %s268
        %s270 = sand.u32 %s99, 1
        %s271 = smul.addr %s270, 64
        %s272 = scalar_lea.vmem [#allocation9], %s271
        %p273 = pneg %p112
        %p274 = pneg %p109
        %p275 = pneg %p138
        %p276 = pneg %p135
        %s277 = sand.u32 %s125, 1
        %s278 = scalar_lea.sflag [#allocation6], %s277
        %s279 = sand.u32 %s125, 1
        %s280 = smul.addr %s279, 8
        %s281 = scalar_lea.vmem [#allocation10], %s280
        %s282 = smul.u32 16, %s28
        %p283 = scmp.eq.s32.totalorder %s28, 0
        // Predicated region
        $region45: #{tpu_custom_call.1} parent=31 // pred_check
          %p284 = pneg %p283
        $region46: #{tpu_custom_call.1} parent=31 // pred_check_branch
          %286 = sbr.rel (%p284) target = $region48
        $region47: #{tpu_custom_call.1} parent=31 // pred_region
          %287 = vst [vmem:[#allocation2] sm:$0xff] 0.0
          %288 = vst [vmem:[#allocation2 + $0x8] sm:$0xff] 0.0
        $region48: #{tpu_custom_call.1} parent=31 // pred_fallthru
          _
        %v289 = vld [vmem:[%s231] sm:$0xff]
        %v290 = vld [vmem:[%s231 + $0x8] sm:$0xff]
        %v291 = vld [vmem:[%s231 + $0x10] sm:$0xff]
        %v292 = vld [vmem:[%s231 + $0x18] sm:$0xff]
        %v293 = vmax.f32 %v289, %v290
        %v294 = vmax.f32 %v291, %v292
        %v295 = vmax.f32 %v293, %v294
        %v296 = vsub.f32 %v289, %v295
        %v297 = vsub.f32 %v290, %v295
        %v298 = vsub.f32 %v291, %v295
        %v299 = vsub.f32 %v292, %v295
        %v300 = vmul.f32 %v296, 1.442695
        %v301 = vpow.pop %v300
        %v302 = vmul.f32 %v297, 1.442695
        %v303 = vpow.pop %v302
        %v304 = vmul.f32 %v298, 1.442695
        %v305 = vpow.pop %v304
        %v306 = vmul.f32 %v299, 1.442695
        %v307 = vpow.pop %v306
        %v308 = vadd.f32 %v301, %v303
        %v309 = vadd.f32 %v308, %v305
        %v310 = vadd.f32 %v309, %v307
        %v311 = vrcp.pop %v310
        %v312 = vmul.f32 %v301, %v311
        %v313 = vmul.f32 %v303, %v311
        %v314 = vmul.f32 %v305, %v311
        %v315 = vmul.f32 %v307, %v311
        %v316 = vrot.slane %v312, 4
        %v317 = vadd.f32 %v312, %v316
        %v318 = vrot.slane %v317, 2
        %v319 = vadd.f32 %v317, %v318
        %v320 = vrot.slane %v319, 1
        %v321 = vadd.f32 %v319, %v320
        %v322 = vrot.slane %v313, 4
        %v323 = vadd.f32 %v313, %v322
        %v324 = vrot.slane %v323, 2
        %v325 = vadd.f32 %v323, %v324
        %v326 = vrot.slane %v325, 1
        %v327 = vadd.f32 %v325, %v326
        %v328 = vrot.slane %v314, 4
        %v329 = vadd.f32 %v314, %v328
        %v330 = vrot.slane %v329, 2
        %v331 = vadd.f32 %v329, %v330
        %v332 = vrot.slane %v331, 1
        %v333 = vadd.f32 %v331, %v332
        %v334 = vrot.slane %v315, 4
        %v335 = vadd.f32 %v315, %v334
        %v336 = vrot.slane %v335, 2
        %v337 = vadd.f32 %v335, %v336
        %v338 = vrot.slane %v337, 1
        %v339 = vadd.f32 %v337, %v338
        %v340 = vrcp.pop 8.0
        %v341 = vmul.f32 %v321, %v340
        %v342 = vmul.f32 %v327, %v340
        %v343 = vmul.f32 %v333, %v340
        %v344 = vmul.f32 %v339, %v340
        %v345 = vld [vmem:[%s240] sm:$0xff]
        %vm346 = vcmp.eq.s32.totalorder %v345, 0
        %vm347 = vcmp.eq.s32.totalorder %v345, 1
        %vm348 = vcmp.eq.s32.totalorder %v345, 2
        %vm349 = vcmp.eq.s32.totalorder %v345, 3
        %v350 = vsel %vm346, 1, 0
        %v351 = vsel %vm347, 1, 0
        %v352 = vsel %vm348, 1, 0
        %v353 = vsel %vm349, 1, 0
        %v354 = vcvt.s32.f32 %v350
        %v355 = vcvt.s32.f32 %v351
        %v356 = vcvt.s32.f32 %v352
        %v357 = vcvt.s32.f32 %v353
        %v358 = vrot.slane %v354, 4
        %v359 = vadd.f32 %v354, %v358
        %v360 = vrot.slane %v359, 2
        %v361 = vadd.f32 %v359, %v360
        %v362 = vrot.slane %v361, 1
        %v363 = vadd.f32 %v361, %v362
        %v364 = vrot.slane %v355, 4
        %v365 = vadd.f32 %v355, %v364
        %v366 = vrot.slane %v365, 2
        %v367 = vadd.f32 %v365, %v366
        %v368 = vrot.slane %v367, 1
        %v369 = vadd.f32 %v367, %v368
        %v370 = vrot.slane %v356, 4
        %v371 = vadd.f32 %v356, %v370
        %v372 = vrot.slane %v371, 2
        %v373 = vadd.f32 %v371, %v372
        %v374 = vrot.slane %v373, 1
        %v375 = vadd.f32 %v373, %v374
        %v376 = vrot.slane %v357, 4
        %v377 = vadd.f32 %v357, %v376
        %v378 = vrot.slane %v377, 2
        %v379 = vadd.f32 %v377, %v378
        %v380 = vrot.slane %v379, 1
        %v381 = vadd.f32 %v379, %v380
        %v382 = vmul.f32 %v363, %v340
        %v383 = vmul.f32 %v369, %v340
        %v384 = vmul.f32 %v375, %v340
        %v385 = vmul.f32 %v381, %v340
        %v386 = vsub.f32 1.0, %v341
        %v387 = vsub.f32 1.0, %v342
        %v388 = vsub.f32 1.0, %v343
        %v389 = vsub.f32 1.0, %v344
        %v390 = vsub.f32 1.0, %v382
        %v391 = vsub.f32 1.0, %v383
        %v392 = vsub.f32 1.0, %v384
        %v393 = vsub.f32 1.0, %v385
        %v394 = vmul.f32 %v341, %v382
        %v395 = vmul.f32 %v342, %v383
        %v396 = vmul.f32 %v343, %v384
        %v397 = vmul.f32 %v344, %v385
        %vm402 = vcmask 1041409
        %v403 = vsel %vm402, %v395, %v394
        %vm404 = vcmask 1042434
        %v405 = vsel %vm404, %v396, %v403
        %vm406 = vcmask 1043459
        %v407 = vsel %vm406, %v397, %v405
        %409 = vst [vmem:[#allocation3] sm:$0xf] %v407
        %v414 = vsel %vm402, %v383, %v382
        %v415 = vsel %vm404, %v384, %v414
        %v416 = vsel %vm406, %v385, %v415
        %418 = vst [vmem:[#allocation3 + $0x4] sm:$0xf] %v416
        %v419 = vmul.f32 %v386, %v390
        %v420 = vmul.f32 %v387, %v391
        %v421 = vmul.f32 %v388, %v392
        %v422 = vmul.f32 %v389, %v393
        %v427 = vsel %vm402, %v420, %v419
        %v428 = vsel %vm404, %v421, %v427
        %v429 = vsel %vm406, %v422, %v428
        %431 = vst [vmem:[#allocation3 + $0x8] sm:$0xf] %v429
        %v436 = vsel %vm402, %v391, %v390
        %v437 = vsel %vm404, %v392, %v436
        %v438 = vsel %vm406, %v393, %v437
        %440 = vst [vmem:[#allocation3 + $0xc] sm:$0xf] %v438
        %v441 = vld [vmem:[%s249] sm:$0xf]
        %v442 = vld [vmem:[%s249 + $0x4] sm:$0xf]
        %v443 = vld [vmem:[%s249 + $0x8] sm:$0xf]
        %v444 = vld [vmem:[%s249 + $0xc] sm:$0xf]
        %v445 = vld [vmem:[%s249 + $0x10] sm:$0xf]
        %v446 = vld [vmem:[%s249 + $0x14] sm:$0xf]
        %v447 = vld [vmem:[%s249 + $0x18] sm:$0xf]
        %v448 = vld [vmem:[%s249 + $0x1c] sm:$0xf]
        %v449 = vld [vmem:[%s249 + $0x20] sm:$0xf]
        %v450 = vld [vmem:[%s249 + $0x24] sm:$0xf]
        %v451 = vld [vmem:[%s249 + $0x28] sm:$0xf]
        %v452 = vld [vmem:[%s249 + $0x2c] sm:$0xf]
        %v453 = vld [vmem:[%s249 + $0x30] sm:$0xf]
        %v454 = vld [vmem:[%s249 + $0x34] sm:$0xf]
        %v455 = vld [vmem:[%s249 + $0x38] sm:$0xf]
        %v456 = vld [vmem:[%s249 + $0x3c] sm:$0xf]
        %v457 = vunpack.c.l.bf16 %v441
        %v458 = vunpack.c.l.bf16 %v442
        %v459 = vunpack.c.l.bf16 %v443
        %v460 = vunpack.c.l.bf16 %v444
        %v461 = vunpack.c.l.bf16 %v445
        %v462 = vunpack.c.l.bf16 %v446
        %v463 = vunpack.c.l.bf16 %v447
        %v464 = vunpack.c.l.bf16 %v448
        %v465 = vunpack.c.l.bf16 %v449
        %v466 = vunpack.c.l.bf16 %v450
        %v467 = vunpack.c.l.bf16 %v451
        %v468 = vunpack.c.l.bf16 %v452
        %v469 = vunpack.c.l.bf16 %v453
        %v470 = vunpack.c.l.bf16 %v454
        %v471 = vunpack.c.l.bf16 %v455
        %v472 = vunpack.c.l.bf16 %v456
        %v473 = vld [vmem:[#allocation2] sm:$0xff]
        %v474 = vld [vmem:[#allocation2 + $0x8] sm:$0xff]
        %v475 = vld [vmem:[#allocation3] sm:$0xff]
        %v476 = vld [vmem:[#allocation3 + $0x8] sm:$0xff]
        %477 = vmatprep.subr.mxu0 0.0
        %478 = vmatpush1.msra.mxu0 %v457
        %479 = vmatprep.subr.mxu0 0.0
        %480 = vmatpush1.msra.mxu0 %v458
        %481 = vmatprep.subr.mxu0 0.0
        %482 = vmatpush1.msra.mxu0 %v459
        %483 = vmatprep.subr.mxu0 0.0
        %484 = vmatpush1.msra.mxu0 %v460
        %485 = vmatprep.subr.mxu0 0.0
        %486 = vmatpush1.msra.mxu0 %v461
        %487 = vmatprep.subr.mxu0 0.0
        %488 = vmatpush1.msra.mxu0 %v462
        %489 = vmatprep.subr.mxu0 0.0
        %490 = vmatpush1.msra.mxu0 %v463
        %491 = vmatprep.subr.mxu0 0.0
        %492 = vmatpush1.msra.mxu0 %v464
        %493 = vmatprep.subr.mxu0 0.0
        %494 = vmatpush1.msra.mxu0 %v465
        %495 = vmatprep.subr.mxu0 0.0
        %496 = vmatpush1.msra.mxu0 %v466
        %497 = vmatprep.subr.mxu0 0.0
        %498 = vmatpush1.msra.mxu0 %v467
        %499 = vmatprep.subr.mxu0 0.0
        %500 = vmatpush1.msra.mxu0 %v468
        %501 = vmatprep.subr.mxu0 0.0
        %502 = vmatpush1.msra.mxu0 %v469
        %503 = vmatprep.subr.mxu0 0.0
        %504 = vmatpush1.msra.mxu0 %v470
        %505 = vmatprep.subr.mxu0 0.0
        %506 = vmatpush1.msra.mxu0 %v471
        %507 = vmatprep.subr.mxu0 0.0
        %508 = vmatpush1.msra.mxu0 %v472
        %509 = vmatprep.subr.mxu0 0.0
        %510 = vmatpush1.msra.mxu0 0.0
        %511 = vmatprep.subr.mxu0 0.0
        %512 = vmatpush1.msra.mxu0 0.0
        %513 = vmatprep.subr.mxu0 0.0
        %514 = vmatpush1.msra.mxu0 0.0
        %515 = vmatprep.subr.mxu0 0.0
        %516 = vmatpush1.msra.mxu0 0.0
        %517 = vmatprep.subr.mxu0 0.0
        %518 = vmatpush1.msra.mxu0 0.0
        %519 = vmatprep.subr.mxu0 0.0
        %520 = vmatpush1.msra.mxu0 0.0
        %521 = vmatprep.subr.mxu0 0.0
        %522 = vmatpush1.msra.mxu0 0.0
        %523 = vmatprep.subr.mxu0 0.0
        %524 = vmatpush1.msra.mxu0 0.0
        %525 = vmatprep.subr.mxu0 0.0
        %526 = vmatpush1.msra.mxu0 0.0
        %527 = vmatprep.subr.mxu0 0.0
        %528 = vmatpush1.msra.mxu0 0.0
        %529 = vmatprep.subr.mxu0 0.0
        %530 = vmatpush1.msra.mxu0 0.0
        %531 = vmatprep.subr.mxu0 0.0
        %532 = vmatpush1.msra.mxu0 0.0
        %533 = vmatprep.subr.mxu0 0.0
        %534 = vmatpush1.msra.mxu0 0.0
        %535 = vmatprep.subr.mxu0 0.0
        %536 = vmatpush1.msra.mxu0 0.0
        %537 = vmatprep.subr.mxu0 0.0
        %538 = vmatpush1.msra.mxu0 0.0
        %539 = vmatprep.subr.mxu0 0.0
        %540 = vmatpush1.msra.mxu0 0.0
        %541 = vmatprep.mubr.f32.mxu0 0.0
        %542 = vmatmul.mubr.f32.gmra.mrb[0].mxu0 %v475
        %v543 = vpop.f32.mrb[0].mxu0
        %v544 = vadd.f32 0.0, %v543
        %v545 = vpop.f32.mrb[0].mxu0
        %546 = vmatprep.mubr.f32.mxu0 0.0
        %547 = vmatmul.mubr.f32.gmra.mrb[0].mxu0 %v476
        %v548 = vpop.f32.mrb[0].mxu0
        %v549 = vadd.f32 0.0, %v548
        %v550 = vpop.f32.mrb[0].mxu0
        %551 = vdwg.mxu0
        %v552 = vadd.f32 %v473, %v544
        %v553 = vadd.f32 %v474, %v549
        %554 = vst [vmem:[#allocation2] sm:$0xff] %v552
        %555 = vst [vmem:[#allocation2 + $0x8] sm:$0xff] %v553
        %p556 = scmp.eq.s32.totalorder %s28, 1
        // Predicated region
        $region49: #{tpu_custom_call.1} parent=31 // pred_check
          %p557 = pneg %p556
        $region50: #{tpu_custom_call.1} parent=31 // pred_check_branch
          %559 = sbr.rel (%p557) target = $region52
        $region51: #{tpu_custom_call.1} parent=31 // pred_region
          %v560 = vld [vmem:[#allocation2] sm:$0xff]
          %v561 = vld [vmem:[#allocation2 + $0x8] sm:$0xff]
          %v562 = vlaneseq
          %v563 = vand.u32 %v562, 127
          %vm564 = vcmp.eq.s32.totalorder %v563, 64
          %v565 = vsel %vm564, 1, 0
          %v566 = vcvt.s32.f32 %v565
          %vm567 = vcmp.lt.s32.totalorder %v563, 32
          %vm568 = vcmp.lt.s32.totalorder %v563, 64
          %v569 = vsel %vm568, 0.70710677, 0.0
          %v570 = vsel %vm567, 1.0, %v569
          %v571 = vmul.f32 %v560, %v566
          %v572 = vmul.f32 %v561, %v566
          %573 = vadd.xlane.f32.xlu0 %v571
          %v574 = vpop.xlane.xlu0 %573
          %575 = vadd.xlane.f32.xlu0 %v572
          %v576 = vpop.xlane.xlu0 %575
          %v577 = vmul.f32 %v574, 0.0625
          %v578 = vmul.f32 %v576, 0.0625
          %v579 = vadd.f32 %v577, 0.5
          %v580 = vadd.f32 %v578, 0.5
          %v581 = vmul.f32 %v579, 16.0
          %v582 = vmul.f32 %v580, 16.0
          %v583 = vrcp.pop %v581
          %v584 = vrcp.pop %v582
          %v585 = vmul.f32 %v560, %v583
          %v586 = vmul.f32 %v561, %v584
          %v588 = vrot.slane %v585, 4
          %v590 = vsub.f32 %v585, %v588
          %v591 = vand.u32 2147483647, %v590
          %v593 = vrot.slane %v586, 4
          %v595 = vsub.f32 %v586, %v593
          %v596 = vand.u32 2147483647, %v595
          %v597 = vadd.f32 %v591, %v596
          %v598 = vmul.f32 %v570, %v597
          %vm599 = vcmask 1043456
          %v600 = vsel %vm599, %v598, 0.0
          %601 = vadd.xlane.f32.xlu0 %v600
          %v602 = vpop.xlane.xlu0 %601
          %v603 = vrot.slane %v602, 4
          %v604 = vadd.f32 %v602, %v603
          %v605 = vrot.slane %v604, 2
          %v606 = vadd.f32 %v604, %v605
          %v607 = vrot.slane %v606, 1
          %v608 = vadd.f32 %v606, %v607
          %s609 = vtos %v608
          %v611 = vrot.slane %v580, 4
          %v613 = vsub.f32 %v580, %v611
          %v614 = vand.u32 2147483647, %v613
          %vm615 = vcmask 3072
          %v616 = vsel %vm615, %v614, 0.0
          %617 = vadd.xlane.f32.xlu0 %v616
          %v618 = vpop.xlane.xlu0 %617
          %v619 = vrot.slane %v618, 4
          %v620 = vadd.f32 %v618, %v619
          %v621 = vrot.slane %v620, 2
          %v622 = vadd.f32 %v620, %v621
          %v623 = vrot.slane %v622, 1
          %v624 = vadd.f32 %v622, %v623
          %s625 = vtos %v624
          %v626 = vlaneseq
          %v627 = vshrl.u32 %v626, 7
          %vm628 = vcmp.eq.s32.totalorder %v627, 0
          %vm629 = vcmp.eq.s32.totalorder %v563, 0
          %vm630 = vmand %vm628, %vm629
          %v631 = vstv %s609
          %v632 = vsel %vm630, %v631, 0.0
          %vm633 = vcmp.eq.s32.totalorder %v563, 1
          %vm634 = vmand %vm628, %vm633
          %v635 = vstv %s625
          %v636 = vsel %vm634, %v635, 0.0
          %v637 = vadd.f32 %v632, %v636
          %638 = vst [vmem:[%s281] sm:$0xff] %v637
        $region52: #{tpu_custom_call.1} parent=31 // pred_fallthru
          _
        %s639 = sand.u32 %s125, 1
        %s640 = scalar_lea.sflag [#allocation6], %s639
        %s641 = sand.u32 %s125, 1
        %s642 = smul.addr %s641, 8
        %s643 = scalar_lea.vmem [#allocation10], %s642
        // Predicated region
        $region53: #{tpu_custom_call.1} parent=31 // pred_check
          %p644 = pneg %p135
        $region54: #{tpu_custom_call.1} parent=31 // pred_check_branch
          %646 = sbr.rel (%p644) target = $region56
        $region55: #{tpu_custom_call.1} parent=31 // pred_region
          %s648 = ssub.s32 128, 128
          %649 = vsyncadd %s640, %s648
          %s650 = smul.addr %s27, 128
          %s651 = scalar_lea.hbm %s3, %s650
          %s653 = sshll.u32 %s643, 4
          %s654 = int_to_ptr.vmem [resolvable:$true] %s653
          %656 = dma.vmem_to_hbm [thread:$0]  %s654, 128, %s651, %s640
        $region56: #{tpu_custom_call.1} parent=31 // pred_fallthru
          _
      $region32: #{tpu_custom_call.1} parent=5 // pred_fallthru
        _
      %p657 = scmp.le.s32.totalorder 2, %s18
      // Predicated region
      $region57: #{tpu_custom_call.1} parent=5 // pred_check
        %p658 = pneg %p657
      $region58: #{tpu_custom_call.1} parent=5 // pred_check_branch
        %660 = sbr.rel (%p658) target = $region60
      $region59: #{tpu_custom_call.1} parent=5 // pred_region
        %s661 = ssub.s32 %s18, 2
        // Predicated region
        $region61: #{tpu_custom_call.1} parent=59 // pred_check
          %p662 = pneg %p141
        $region62: #{tpu_custom_call.1} parent=59 // pred_check_branch
          %664 = sbr.rel (%p662) target = $region64
        $region63: #{tpu_custom_call.1} parent=59 // pred_region
          %s665 = sand.u32 %s126, 1
          %s666 = scalar_lea.sflag [#allocation6], %s665
          %s667 = sand.u32 %s126, 1
          %s668 = smul.addr %s667, 8
          %s669 = scalar_lea.vmem [#allocation10], %s668
          %670 = dma.done %s666, 128
        $region64: #{tpu_custom_call.1} parent=59 // pred_fallthru
          _
      $region60: #{tpu_custom_call.1} parent=5 // pred_fallthru
        _
    $region6: #{tpu_custom_call.1} parent=1 // loop_footer
      %s22 = sadd.s32 1, %s18
    $region7: #{tpu_custom_call.1} parent=1 // loop_footer_branch
      %17 = sbr.rel target = $region3
    $region8: #{tpu_custom_call.1} parent=1 // loop_exit
      _
    %671 = vsyncpa [#allocation5], 1
    %s672 = scalar_lea.sflag [#allocation5], 1
    %673 = vsyncpa %s672, 1
    %674 = vsyncpa [#allocation8], 1
    %s675 = scalar_lea.sflag [#allocation8], 1
    %676 = vsyncpa %s675, 1
    %677 = vsyncpa [#allocation6], 1
    %s678 = scalar_lea.sflag [#allocation6], 1
    %679 = vsyncpa %s678, 1

</llo_original>
